<compile_context>
chip_gen: v6e
topology: v6e:2x2x1
jax: 0.10.0
libtpu: 0.0.40
codegen_flags: <defaults>
</compile_context>

<pallas_src>
import functools
import math

import jax
import jax.numpy as jnp
from jax.experimental import pallas as pl
from jax.experimental.pallas import tpu as pltpu

EPS = 1e-5
MOMENTUM = 0.9

_DEFAULT_BLOCK_BYTES = 2 << 20        # padded VMEM bytes per streamed block
_DEFAULT_MAX_BLOCK_ROWS = 1024
_GRIDDED_VMEM_LIMIT = 32 << 20        # scoped VMEM for the gridded passes


def _round_up(x, m):
    return ((x + m - 1) // m) * m


def _tpu_vmem_bytes():
    """Physical VMEM of this generation; conservative (v7x) fallback."""
    try:
        return int(pltpu.get_tpu_info().vmem_capacity_bytes)
    except Exception:
        return 64 << 20


def _reduce_axes(ndim):
    """All axes except the channel axis (axis 1)."""
    return tuple(a for a in range(ndim) if a != 1)


def _sum_keep(x, axes):
    """Reduce batch axis first (cheap VPU adds), lane axis last (one XLU op)."""
    for a in sorted(axes):
        x = jnp.sum(x, axis=a, keepdims=True)
    return x


def _chan_shape(ndim, c):
    """Per-channel vector shape: 1 everywhere except C on axis 1."""
    return tuple(c if a == 1 else 1 for a in range(ndim))


def _padded_row_bytes(shape_tail, itemsize):
    """Padded VMEM bytes of one leading-axis row, honoring (8,128) tiling."""
    if len(shape_tail) == 1:
        return _round_up(shape_tail[0], 128) * itemsize
    sub = _round_up(shape_tail[-2], 8)
    lane = _round_up(shape_tail[-1], 128)
    lead = math.prod(shape_tail[:-2]) if len(shape_tail) > 2 else 1
    return lead * sub * lane * itemsize


def _pick_block_rows(n, padded_row_bytes, budget_bytes, max_rows, sublane_mult):
    """Largest leading-axis row count whose padded tile fits the budget.

    When the rows sit on the sublane axis (2-D views) the count must be a
    multiple of 8 unless it equals the full extent n (the (8,128) rule).
    """
    cap = max(1, min(max_rows, budget_bytes // max(padded_row_bytes, 1)))
    if cap >= n:
        return n
    if sublane_mult > 1:
        cap = max(sublane_mult, (cap // sublane_mult) * sublane_mult)
        if cap >= n:
            return n
    return cap


# --------------------------------------------------------------------------
# Kernels
# --------------------------------------------------------------------------
def _train_stats_kernel(inv_m, n_rows, block_rows,
                        x_ref, mm_ref, mv_ref, gamma_ref, beta_ref,
                        scale_ref, bias_ref, new_mm_ref, new_mv_ref,
                        sum_acc, sq_acc):
    """Training pass 1: streamed single-pass sum / sum-of-squares per channel."""
    i = pl.program_id(0)

    @pl.when(i == 0)
    def _init():
        sum_acc[...] = jnp.zeros_like(sum_acc)
        sq_acc[...] = jnp.zeros_like(sq_acc)

    x = x_ref[...].astype(jnp.float32)
    # cdiv grid: mask rows of the partial last block (emitted only if needed).
    if n_rows % block_rows != 0:
        row = jax.lax.broadcasted_iota(jnp.int32, x.shape, 0)
        x = jnp.where(row < (n_rows - i * block_rows), x, 0.0)

    axes = _reduce_axes(x.ndim)
    sum_acc[...] += _sum_keep(x, axes)
    sq_acc[...] += _sum_keep(x * x, axes)

    @pl.when(i == pl.num_programs(0) - 1)
    def _finalize():
        mean = sum_acc[...] * inv_m
        # Biased variance (matches the reference module).  Clamp guards tiny
        # negatives that E[x^2] - E[x]^2 can produce in f32.
        var = jnp.maximum(sq_acc[...] * inv_m - mean * mean, 0.0)
        scale = gamma_ref[...] * jax.lax.rsqrt(var + EPS)
        scale_ref[...] = scale
        bias_ref[...] = beta_ref[...] - mean * scale
        new_mm_ref[...] = MOMENTUM * mm_ref[...] + (1.0 - MOMENTUM) * mean
        new_mv_ref[...] = MOMENTUM * mv_ref[...] + (1.0 - MOMENTUM) * var


def _scale_bias_kernel(x_ref, scale_ref, bias_ref, y_ref):
    """Lane-dense elementwise pass: y = x * scale + bias."""
    x = x_ref[...].astype(jnp.float32)
    y_ref[...] = (x * scale_ref[...] + bias_ref[...]).astype(y_ref.dtype)


def _train_fused_kernel(inv_m, x_ref, mm_ref, mv_ref, gamma_ref, beta_ref,
                        y_ref, new_mm_ref, new_mv_ref):
    """Training fast path: whole tensor in one block -> single HBM read."""
    x = x_ref[...].astype(jnp.float32)
    axes = _reduce_axes(x.ndim)
    mean = _sum_keep(x, axes) * inv_m
    var = jnp.maximum(_sum_keep(x * x, axes) * inv_m - mean * mean, 0.0)
    scale = gamma_ref[...] * jax.lax.rsqrt(var + EPS)
    bias = beta_ref[...] - mean * scale
    y_ref[...] = (x * scale + bias).astype(y_ref.dtype)
    new_mm_ref[...] = MOMENTUM * mm_ref[...] + (1.0 - MOMENTUM) * mean
    new_mv_ref[...] = MOMENTUM * mv_ref[...] + (1.0 - MOMENTUM) * var


# --------------------------------------------------------------------------
# Wrapper
# --------------------------------------------------------------------------
def quantize_batch_norm(x, moving_mean, moving_var, gamma=None, beta=None,
                        *, affine=False, train=True,
                        block_bytes=_DEFAULT_BLOCK_BYTES,
                        max_block_rows=_DEFAULT_MAX_BLOCK_ROWS,
                        fused_budget_bytes=None):
    """Forward of QuantizeBatchNorm. Returns (Y, new_moving_mean, new_moving_var)."""
    assert x.ndim in (2, 4)
    N, C = x.shape[0], x.shape[1]

    if x.ndim == 4:
        _, _, H, W = x.shape
        HW = H * W
        xs = x.reshape(N, C, HW)         # stats view (C on sublanes) — free reshape
        xf = x.reshape(N, C * HW)        # lane-dense elementwise view — free reshape
        stat_shape = (1, C, 1, 1)
    else:
        HW = 1
        xs = x
        xf = x
        stat_shape = (1, C)

    F = xf.shape[1]
    cshape = _chan_shape(xs.ndim, C)
    y_dtype = x.dtype if jnp.issubdtype(x.dtype, jnp.floating) else jnp.float32
    in_itemsize = x.dtype.itemsize
    out_itemsize = jnp.dtype(y_dtype).itemsize

    mm = moving_mean.reshape(cshape).astype(jnp.float32)
    mv = moving_var.reshape(cshape).astype(jnp.float32)
    if affine:
        g = gamma.reshape(cshape).astype(jnp.float32)
        b = beta.reshape(cshape).astype(jnp.float32)
    else:
        g = jnp.ones(cshape, jnp.float32)
        b = jnp.zeros(cshape, jnp.float32)

    inv_m = 1.0 / float(N * HW)
    c_spec = pl.BlockSpec(cshape, lambda i: (0,) * len(cshape))

    def _expand_flat(v):
        """Per-channel (1,C[,1]) -> lane-dense (1, C*H*W); tiny one-off XLA op."""
        if x.ndim == 4:
            v = jnp.broadcast_to(v.reshape(1, C, 1), (1, C, HW)).reshape(1, F)
        return v.reshape(1, F)

    def _elementwise(x_flat, scale_flat, bias_flat):
        """Lane-dense y = x*scale + bias over the flat (N, F) view."""
        pad_row = (_padded_row_bytes((F,), in_itemsize)
                   + _padded_row_bytes((F,), out_itemsize))
        bn = _pick_block_rows(N, pad_row, block_bytes, max_block_rows,
                              sublane_mult=8)
        nb = pl.cdiv(N, bn)
        row_spec = pl.BlockSpec((bn, F), lambda i: (i, 0))
        vec_spec = pl.BlockSpec((1, F), lambda i: (0, 0))
        return pl.pallas_call(
            _scale_bias_kernel,
            grid=(nb,),
            in_specs=[row_spec, vec_spec, vec_spec],
            out_specs=row_spec,
            out_shape=jax.ShapeDtypeStruct((N, F), y_dtype),
            compiler_params=pltpu.CompilerParams(
                dimension_semantics=("parallel",),
                vmem_limit_bytes=_GRIDDED_VMEM_LIMIT),
        )(x_flat, scale_flat, bias_flat)

    if not train:
        # Fold everything into per-channel scale/bias once (C floats of XLA).
        scale_c = g / jnp.sqrt(mv + EPS)
        bias_c = b - mm * scale_c
        y = _elementwise(xf, _expand_flat(scale_c), _expand_flat(bias_c))
        new_mm, new_mv = mm, mv          # moving stats unchanged in eval
    else:
        vmem_phys = _tpu_vmem_bytes()
        budget = (vmem_phys // 8) if fused_budget_bytes is None else fused_budget_bytes
        pad_in_total = N * _padded_row_bytes(xs.shape[1:], in_itemsize)
        pad_out_total = N * _padded_row_bytes(xs.shape[1:], out_itemsize)

        if pad_in_total + pad_out_total <= budget:
            # Whole (padded) tensor fits: single HBM read, fully fused.
            full_spec = pl.BlockSpec(xs.shape, lambda i: (0,) * xs.ndim)
            y, new_mm, new_mv = pl.pallas_call(
                functools.partial(_train_fused_kernel, inv_m),
                grid=(1,),
                in_specs=[full_spec, c_spec, c_spec, c_spec, c_spec],
                out_specs=(full_spec, c_spec, c_spec),
                out_shape=(jax.ShapeDtypeStruct(xs.shape, y_dtype),
                           jax.ShapeDtypeStruct(cshape, jnp.float32),
                           jax.ShapeDtypeStruct(cshape, jnp.float32)),
                compiler_params=pltpu.CompilerParams(
                    dimension_semantics=("arbitrary",),
                    vmem_limit_bytes=vmem_phys // 2),
            )(xs, mm, mv, g, b)
        else:
            # Pass 1: streamed per-channel stats over the (N, C, H*W) view.
            pad_row = _padded_row_bytes(xs.shape[1:], in_itemsize)
            sub_mult = 8 if xs.ndim == 2 else 1
            bn = _pick_block_rows(N, pad_row, block_bytes, max_block_rows,
                                  sublane_mult=sub_mult)
            nb = pl.cdiv(N, bn)
            zeros_tail = (0,) * (xs.ndim - 1)
            xs_spec = pl.BlockSpec((bn,) + tuple(xs.shape[1:]),
                                   lambda i: (i,) + zeros_tail)
            scale_c, bias_c, new_mm, new_mv = pl.pallas_call(
                functools.partial(_train_stats_kernel, inv_m, N, bn),
                grid=(nb,),
                in_specs=[xs_spec, c_spec, c_spec, c_spec, c_spec],
                out_specs=(c_spec, c_spec, c_spec, c_spec),
                out_shape=tuple(jax.ShapeDtypeStruct(cshape, jnp.float32)
                                for _ in range(4)),
                scratch_shapes=[pltpu.VMEM(cshape, jnp.float32),
                                pltpu.VMEM(cshape, jnp.float32)],
                compiler_params=pltpu.CompilerParams(
                    dimension_semantics=("arbitrary",),
                    vmem_limit_bytes=_GRIDDED_VMEM_LIMIT),
            )(xs, mm, mv, g, b)
            # Pass 2: lane-dense normalize over the flat (N, C*H*W) view.
            y = _elementwise(xf, _expand_flat(scale_c), _expand_flat(bias_c))

    y = y.reshape(x.shape)
    return y, new_mm.reshape(stat_shape), new_mv.reshape(stat_shape)


# --------------------------------------------------------------------------
# Self-test
# --------------------------------------------------------------------------
if __name__ == "__main__":
    key = jax.random.PRNGKey(0)
    k1, k2, k3, k4 = jax.random.split(key, 4)

    def ref_train(x, mm, mv, g=None, b=None):
        axes = (0,) if x.ndim == 2 else (0, 2, 3)
        keep = (x.ndim == 4)
        mean = jnp.mean(x, axis=axes, keepdims=keep)
        var = jnp.mean((x - mean) ** 2, axis=axes, keepdims=keep)
        xh = (x - mean) / jnp.sqrt(var + EPS)
        y = xh if g is None else g * xh + b
        new_mm = MOMENTUM * mm + (1.0 - MOMENTUM) * mean.reshape(mm.shape)
        new_mv = MOMENTUM * mv + (1.0 - MOMENTUM) * var.reshape(mv.shape)
        return y, new_mm, new_mv

    # ---- 4-D training, fused single-read path (module defaults) ----
    N, C, H, W = 2, 4, 16, 16
    x = jax.random.normal(k1, (N, C, H, W), dtype=jnp.float32)
    mm0 = jnp.zeros((1, C, 1, 1), jnp.float32)
    mv0 = jnp.ones((1, C, 1, 1), jnp.float32)
    y, nmm, nmv = quantize_batch_norm(x, mm0, mv0, affine=False, train=True)
    jax.block_until_ready((y, nmm, nmv))
    y_r, mm_r, mv_r = ref_train(x, mm0, mv0)
    assert jnp.allclose(y, y_r, atol=1e-4, rtol=1e-4)
    assert jnp.allclose(nmm, mm_r, atol=1e-5, rtol=1e-5)
    assert jnp.allclose(nmv, mv_r, atol=1e-5, rtol=1e-5)

    # ---- 4-D training, forced two-pass path with odd batch (cdiv + masking) ----
    N2 = 10
    x2 = jax.random.normal(k2, (N2, C, H, W), dtype=jnp.float32)
    y2, mm2, mv2 = quantize_batch_norm(
        x2, mm0, mv0, affine=False, train=True,
        fused_budget_bytes=0,                 # force streamed two-pass path
        block_bytes=32 * 1024)                # small blocks -> multi-step grid
    jax.block_until_ready((y2, mm2, mv2))
    y2_r, mm2_r, mv2_r = ref_train(x2, mm0, mv0)
    assert jnp.allclose(y2, y2_r, atol=1e-4, rtol=1e-4)
    assert jnp.allclose(mm2, mm2_r, atol=1e-5, rtol=1e-5)
    assert jnp.allclose(mv2, mv2_r, atol=1e-5, rtol=1e-5)

    # ---- 4-D inference ----
    mm_in = 0.1 * jnp.arange(C, dtype=jnp.float32).reshape(1, C, 1, 1)
    mv_in = 1.0 + 0.05 * jnp.arange(C, dtype=jnp.float32).reshape(1, C, 1, 1)
    ye, mme, mve = quantize_batch_norm(x, mm_in, mv_in, affine=False, train=False)
    jax.block_until_ready(ye)
    ye_r = (x - mm_in) / jnp.sqrt(mv_in + EPS)
    assert jnp.allclose(ye, ye_r, atol=1e-4, rtol=1e-4)
    assert jnp.allclose(mme, mm_in, atol=1e-6)
    assert jnp.allclose(mve, mv_in, atol=1e-6)

    # ---- 2-D training with affine, fused path ----
    Nf, Fd = 16, 32
    xf = jax.random.normal(k3, (Nf, Fd), dtype=jnp.float32)
    gamma = 1.0 + 0.01 * jnp.arange(Fd, dtype=jnp.float32).reshape(1, Fd)
    beta = 0.02 * jnp.arange(Fd, dtype=jnp.float32).reshape(1, Fd)
    mmf = jnp.zeros((1, Fd), jnp.float32)
    mvf = jnp.ones((1, Fd), jnp.float32)
    yf, mmf_n, mvf_n = quantize_batch_norm(
        xf, mmf, mvf, gamma, beta, affine=True, train=True)
    jax.block_until_ready(yf)
    yf_r, mmf_r, mvf_r = ref_train(xf, mmf, mvf, gamma, beta)
    assert jnp.allclose(yf, yf_r, atol=1e-4, rtol=1e-4)
    assert jnp.allclose(mmf_n, mmf_r, atol=1e-5, rtol=1e-5)
    assert jnp.allclose(mvf_n, mvf_r, atol=1e-5, rtol=1e-5)

    # ---- 2-D training with affine, forced two-pass path, awkward batch ----
    Ng = 20
    xg = jax.random.normal(k4, (Ng, Fd), dtype=jnp.float32)
    yg, mmg_n, mvg_n = quantize_batch_norm(
        xg, mmf, mvf, gamma, beta, affine=True, train=True,
        fused_budget_bytes=0, block_bytes=4096)
    jax.block_until_ready(yg)
    yg_r, mmg_r, mvg_r = ref_train(xg, mmf, mvf, gamma, beta)
    assert jnp.allclose(yg, yg_r, atol=1e-4, rtol=1e-4)
    assert jnp.allclose(mmg_n, mmg_r, atol=1e-5, rtol=1e-5)
    assert jnp.allclose(mvg_n, mvg_r, atol=1e-5, rtol=1e-5)

    print("KERNEL_OK")
</pallas_src>

<mosaic_0001>
module attributes {stable_mosaic.version = 11 : i64} {
  func.func @_train_fused_kernel(%arg0: i32, %arg1: memref<2x4x256xf32, #tpu.memory_space<vmem>>, %arg2: memref<1x4x1xf32, #tpu.memory_space<vmem>>, %arg3: memref<1x4x1xf32, #tpu.memory_space<vmem>>, %arg4: memref<1x4x1xf32, #tpu.memory_space<vmem>>, %arg5: memref<1x4x1xf32, #tpu.memory_space<vmem>>, %arg6: memref<2x4x256xf32, #tpu.memory_space<vmem>>, %arg7: memref<1x4x1xf32, #tpu.memory_space<vmem>>, %arg8: memref<1x4x1xf32, #tpu.memory_space<vmem>>) attributes {dimension_semantics = [#tpu.dimension_semantics<arbitrary>], iteration_bounds = array<i64: 1>, scalar_prefetch = 0 : i64, scratch_operands = 0 : i64, tpu.core_type = #tpu.core_type<tc>, window_params = [{pipeline_mode = #tpu.pipeline_mode<synchronous>, transform_indices = @transform_0, window_bounds = array<i64: 2, 4, 256>}, {pipeline_mode = #tpu.pipeline_mode<synchronous>, transform_indices = @transform_1, window_bounds = array<i64: 1, 4, 1>}, {pipeline_mode = #tpu.pipeline_mode<synchronous>, transform_indices = @transform_2, window_bounds = array<i64: 1, 4, 1>}, {pipeline_mode = #tpu.pipeline_mode<synchronous>, transform_indices = @transform_3, window_bounds = array<i64: 1, 4, 1>}, {pipeline_mode = #tpu.pipeline_mode<synchronous>, transform_indices = @transform_4, window_bounds = array<i64: 1, 4, 1>}, {pipeline_mode = #tpu.pipeline_mode<synchronous>, transform_indices = @transform_5, window_bounds = array<i64: 2, 4, 256>}, {pipeline_mode = #tpu.pipeline_mode<synchronous>, transform_indices = @transform_6, window_bounds = array<i64: 1, 4, 1>}, {pipeline_mode = #tpu.pipeline_mode<synchronous>, transform_indices = @transform_7, window_bounds = array<i64: 1, 4, 1>}]} {
    %c0 = arith.constant 0 : index
    %c0_0 = arith.constant 0 : index
    %c0_1 = arith.constant 0 : index
    %0 = vector.load %arg1[%c0, %c0_0, %c0_1] : memref<2x4x256xf32, #tpu.memory_space<vmem>>, vector<2x4x256xf32>
    %cst = arith.constant dense<0.000000e+00> : vector<4x256xf32>
    %1 = vector.multi_reduction <add>, %0, %cst [0] : vector<2x4x256xf32> to vector<4x256xf32>
    %2 = vector.shape_cast %1 : vector<4x256xf32> to vector<1x4x256xf32>
    %cst_2 = arith.constant dense<0.000000e+00> : vector<1x4xf32>
    %3 = vector.multi_reduction <add>, %2, %cst_2 [2] : vector<1x4x256xf32> to vector<1x4xf32>
    %4 = vector.shape_cast %3 : vector<1x4xf32> to vector<1x4x1xf32>
    %cst_3 = arith.constant 0.001953125 : f32
    %5 = vector.broadcast %cst_3 : f32 to vector<1x4x1xf32>
    %6 = arith.mulf %4, %5 : vector<1x4x1xf32>
    %7 = arith.mulf %0, %0 : vector<2x4x256xf32>
    %cst_4 = arith.constant dense<0.000000e+00> : vector<4x256xf32>
    %8 = vector.multi_reduction <add>, %7, %cst_4 [0] : vector<2x4x256xf32> to vector<4x256xf32>
    %9 = vector.shape_cast %8 : vector<4x256xf32> to vector<1x4x256xf32>
    %cst_5 = arith.constant dense<0.000000e+00> : vector<1x4xf32>
    %10 = vector.multi_reduction <add>, %9, %cst_5 [2] : vector<1x4x256xf32> to vector<1x4xf32>
    %11 = vector.shape_cast %10 : vector<1x4xf32> to vector<1x4x1xf32>
    %cst_6 = arith.constant 0.001953125 : f32
    %12 = vector.broadcast %cst_6 : f32 to vector<1x4x1xf32>
    %13 = arith.mulf %11, %12 : vector<1x4x1xf32>
    %14 = arith.mulf %6, %6 : vector<1x4x1xf32>
    %15 = arith.subf %13, %14 : vector<1x4x1xf32>
    %cst_7 = arith.constant 0.000000e+00 : f32
    %16 = vector.broadcast %cst_7 : f32 to vector<1x4x1xf32>
    %17 = arith.maximumf %15, %16 : vector<1x4x1xf32>
    %c0_8 = arith.constant 0 : index
    %c0_9 = arith.constant 0 : index
    %c0_10 = arith.constant 0 : index
    %18 = vector.load %arg4[%c0_8, %c0_9, %c0_10] : memref<1x4x1xf32, #tpu.memory_space<vmem>>, vector<1x4x1xf32>
    %cst_11 = arith.constant 9.99999974E-6 : f32
    %19 = vector.broadcast %cst_11 : f32 to vector<1x4x1xf32>
    %20 = arith.addf %17, %19 : vector<1x4x1xf32>
    %21 = math.rsqrt %20 : vector<1x4x1xf32>
    %22 = arith.mulf %18, %21 : vector<1x4x1xf32>
    %c0_12 = arith.constant 0 : index
    %c0_13 = arith.constant 0 : index
    %c0_14 = arith.constant 0 : index
    %23 = vector.load %arg5[%c0_12, %c0_13, %c0_14] : memref<1x4x1xf32, #tpu.memory_space<vmem>>, vector<1x4x1xf32>
    %24 = arith.mulf %6, %22 : vector<1x4x1xf32>
    %25 = arith.subf %23, %24 : vector<1x4x1xf32>
    %26 = vector.broadcast %22 : vector<1x4x1xf32> to vector<2x4x256xf32>
    %27 = arith.mulf %0, %26 : vector<2x4x256xf32>
    %28 = vector.broadcast %25 : vector<1x4x1xf32> to vector<2x4x256xf32>
    %29 = arith.addf %27, %28 : vector<2x4x256xf32>
    %c0_15 = arith.constant 0 : index
    %c0_16 = arith.constant 0 : index
    %c0_17 = arith.constant 0 : index
    %30 = vector.load %arg6[%c0_15, %c0_16, %c0_17] : memref<2x4x256xf32, #tpu.memory_space<vmem>>, vector<2x4x256xf32>
    tpu.vector_store %arg6[%c0_15, %c0_16, %c0_17], %29 {strides = array<i32>} : memref<2x4x256xf32, #tpu.memory_space<vmem>>, vector<2x4x256xf32>,
    %c0_18 = arith.constant 0 : index
    %c0_19 = arith.constant 0 : index
    %c0_20 = arith.constant 0 : index
    %31 = vector.load %arg2[%c0_18, %c0_19, %c0_20] : memref<1x4x1xf32, #tpu.memory_space<vmem>>, vector<1x4x1xf32>
    %cst_21 = arith.constant 0.899999976 : f32
    %32 = vector.broadcast %cst_21 : f32 to vector<1x4x1xf32>
    %33 = arith.mulf %32, %31 : vector<1x4x1xf32>
    %cst_22 = arith.constant 1.000000e-01 : f32
    %34 = vector.broadcast %cst_22 : f32 to vector<1x4x1xf32>
    %35 = arith.mulf %34, %6 : vector<1x4x1xf32>
    %36 = arith.addf %33, %35 : vector<1x4x1xf32>
    %c0_23 = arith.constant 0 : index
    %c0_24 = arith.constant 0 : index
    %c0_25 = arith.constant 0 : index
    %37 = vector.load %arg7[%c0_23, %c0_24, %c0_25] : memref<1x4x1xf32, #tpu.memory_space<vmem>>, vector<1x4x1xf32>
    tpu.vector_store %arg7[%c0_23, %c0_24, %c0_25], %36 {strides = array<i32>} : memref<1x4x1xf32, #tpu.memory_space<vmem>>, vector<1x4x1xf32>,
    %c0_26 = arith.constant 0 : index
    %c0_27 = arith.constant 0 : index
    %c0_28 = arith.constant 0 : index
    %38 = vector.load %arg3[%c0_26, %c0_27, %c0_28] : memref<1x4x1xf32, #tpu.memory_space<vmem>>, vector<1x4x1xf32>
    %cst_29 = arith.constant 0.899999976 : f32
    %39 = vector.broadcast %cst_29 : f32 to vector<1x4x1xf32>
    %40 = arith.mulf %39, %38 : vector<1x4x1xf32>
    %cst_30 = arith.constant 1.000000e-01 : f32
    %41 = vector.broadcast %cst_30 : f32 to vector<1x4x1xf32>
    %42 = arith.mulf %41, %17 : vector<1x4x1xf32>
    %43 = arith.addf %40, %42 : vector<1x4x1xf32>
    %c0_31 = arith.constant 0 : index
    %c0_32 = arith.constant 0 : index
    %c0_33 = arith.constant 0 : index
    %44 = vector.load %arg8[%c0_31, %c0_32, %c0_33] : memref<1x4x1xf32, #tpu.memory_space<vmem>>, vector<1x4x1xf32>
    tpu.vector_store %arg8[%c0_31, %c0_32, %c0_33], %43 {strides = array<i32>} : memref<1x4x1xf32, #tpu.memory_space<vmem>>, vector<1x4x1xf32>,
    return
  }
  func.func @transform_0(%arg0: i32) -> (i32, i32, i32) {
    %c0_i32 = arith.constant 0 : i32
    %c0_i32_0 = arith.constant 0 : i32
    %c0_i32_1 = arith.constant 0 : i32
    %c0_i32_2 = arith.constant 0 : i32
    return %c0_i32, %c0_i32_0, %c0_i32_1 : i32, i32, i32
  }
  func.func @transform_1(%arg0: i32) -> (i32, i32, i32) {
    %c0_i32 = arith.constant 0 : i32
    %c0_i32_0 = arith.constant 0 : i32
    %c0_i32_1 = arith.constant 0 : i32
    %c0_i32_2 = arith.constant 0 : i32
    return %c0_i32, %c0_i32_0, %c0_i32_1 : i32, i32, i32
  }
  func.func @transform_2(%arg0: i32) -> (i32, i32, i32) {
    %c0_i32 = arith.constant 0 : i32
    %c0_i32_0 = arith.constant 0 : i32
    %c0_i32_1 = arith.constant 0 : i32
    %c0_i32_2 = arith.constant 0 : i32
    return %c0_i32, %c0_i32_0, %c0_i32_1 : i32, i32, i32
  }
  func.func @transform_3(%arg0: i32) -> (i32, i32, i32) {
    %c0_i32 = arith.constant 0 : i32
    %c0_i32_0 = arith.constant 0 : i32
    %c0_i32_1 = arith.constant 0 : i32
    %c0_i32_2 = arith.constant 0 : i32
    return %c0_i32, %c0_i32_0, %c0_i32_1 : i32, i32, i32
  }
  func.func @transform_4(%arg0: i32) -> (i32, i32, i32) {
    %c0_i32 = arith.constant 0 : i32
    %c0_i32_0 = arith.constant 0 : i32
    %c0_i32_1 = arith.constant 0 : i32
    %c0_i32_2 = arith.constant 0 : i32
    return %c0_i32, %c0_i32_0, %c0_i32_1 : i32, i32, i32
  }
  func.func @transform_5(%arg0: i32) -> (i32, i32, i32) {
    %c0_i32 = arith.constant 0 : i32
    %c0_i32_0 = arith.constant 0 : i32
    %c0_i32_1 = arith.constant 0 : i32
    %c0_i32_2 = arith.constant 0 : i32
    return %c0_i32, %c0_i32_0, %c0_i32_1 : i32, i32, i32
  }
  func.func @transform_6(%arg0: i32) -> (i32, i32, i32) {
    %c0_i32 = arith.constant 0 : i32
    %c0_i32_0 = arith.constant 0 : i32
    %c0_i32_1 = arith.constant 0 : i32
    %c0_i32_2 = arith.constant 0 : i32
    return %c0_i32, %c0_i32_0, %c0_i32_1 : i32, i32, i32
  }
  func.func @transform_7(%arg0: i32) -> (i32, i32, i32) {
    %c0_i32 = arith.constant 0 : i32
    %c0_i32_0 = arith.constant 0 : i32
    %c0_i32_1 = arith.constant 0 : i32
    %c0_i32_2 = arith.constant 0 : i32
    return %c0_i32, %c0_i32_0, %c0_i32_1 : i32, i32, i32
  }
}

</mosaic_0001>

<llo_original>
// kernel: tpu_custom_call.1
$region0: #{tpu_custom_call.1}
  #allocation0 [shape = 'u32[]', space=smem, size = 0x4, offset = 0x4, fixed_abs, tag = 'smem constant byte address 0x4 - core index']
  #allocation1 [shape = 'u32[144,128]{1,0:T(1,128)}', space=vmem, size = 0x12000, scoped, tag = 'internal scratch']
  %s0 = inlined_call_operand.vmem [shape: f32[2,4,256], index: 0, kind: input, shape index: {}]
  %s1 = inlined_call_operand.vmem [shape: f32[1,4,1], index: 1, kind: input, shape index: {}]
  %s2 = inlined_call_operand.vmem [shape: f32[1,4,1], index: 2, kind: input, shape index: {}]
  %s3 = inlined_call_operand.vmem [shape: f32[1,4,1], index: 3, kind: input, shape index: {}]
  %s4 = inlined_call_operand.vmem [shape: f32[1,4,1], index: 4, kind: input, shape index: {}]
  %s5 = inlined_call_operand.hbm [shape: f32[2,4,256], index: 5, kind: output, shape index: {0}]
  %s6 = inlined_call_operand.vmem [shape: f32[1,4,1], index: 6, kind: output, shape index: {1}]
  %s7 = inlined_call_operand.vmem [shape: f32[1,4,1], index: 7, kind: output, shape index: {2}]
  %8 = xla_tuple %s5, %s6, %s7
  %s9 = sld [smem:[#allocation0]]
  $region46: #{tpu_custom_call.1} parent=0
    _
  %s11 = ssub.s32 1, %s9
  %s12 = scalar_select 0, %s11, %s9
  $region1: #{tpu_custom_call.1} parent=0
    #allocation2 [shape = 'u8[8192]{0}', space=vmem, size = 0x2000, scoped, tag = 'output window, operand 0, single buffered']
    #allocation3 [shape = 's32[1]{0}', space=sflag, size = 0x4, scoped, tag = 'scoped memory for tpu_custom_call.1']
    %13 = vsyncpa [#allocation3], 0
    // Predicated region
    $region2: #{tpu_custom_call.1} parent=1 // pred_check
      _
    $region3: #{tpu_custom_call.1} parent=1 // pred_check_branch
      %15 = sbr.rel (0) target = $region5
    $region4: #{tpu_custom_call.1} parent=1 // pred_region
      _
    $region5: #{tpu_custom_call.1} parent=1 // pred_fallthru
      _
    // Predicated region
    $region6: #{tpu_custom_call.1} parent=1 // pred_check
      _
    $region7: #{tpu_custom_call.1} parent=1 // pred_check_branch
      %17 = sbr.rel (0) target = $region9
    $region8: #{tpu_custom_call.1} parent=1 // pred_region
      _
    $region9: #{tpu_custom_call.1} parent=1 // pred_fallthru
      _
    // Predicated region
    $region10: #{tpu_custom_call.1} parent=1 // pred_check
      _
    $region11: #{tpu_custom_call.1} parent=1 // pred_check_branch
      %19 = sbr.rel (0) target = $region13
    $region12: #{tpu_custom_call.1} parent=1 // pred_region
      _
    $region13: #{tpu_custom_call.1} parent=1 // pred_fallthru
      _
    // Predicated region
    $region14: #{tpu_custom_call.1} parent=1 // pred_check
      _
    $region15: #{tpu_custom_call.1} parent=1 // pred_check_branch
      %21 = sbr.rel (0) target = $region17
    $region16: #{tpu_custom_call.1} parent=1 // pred_region
      _
    $region17: #{tpu_custom_call.1} parent=1 // pred_fallthru
      _
    // Predicated region
    $region18: #{tpu_custom_call.1} parent=1 // pred_check
      _
    $region19: #{tpu_custom_call.1} parent=1 // pred_check_branch
      %23 = sbr.rel (0) target = $region21
    $region20: #{tpu_custom_call.1} parent=1 // pred_region
      _
    $region21: #{tpu_custom_call.1} parent=1 // pred_fallthru
      _
    %v24 = vld [vmem:[%s0] sm:$0xff]
    %v25 = vld [vmem:[%s0 + $0x8] sm:$0xff]
    %v28 = vcombine.high %v24, %v24
    %v29 = vcombine.high %v25, %v25
    %vm32 = vcmask 1043456
    %v33 = vsel %vm32, %v24, 0.0
    %v34 = vsel %vm32, %v25, 0.0
    %v35 = vadd.f32 %v33, %v34
    %v36 = vsel %vm32, %v28, 0.0
    %v37 = vsel %vm32, %v29, 0.0
    %v38 = vadd.f32 %v36, %v37
    %v39 = vsel %vm32, %v35, 0.0
    %v40 = vsel %vm32, %v38, 0.0
    %v41 = vadd.f32 %v39, %v40
    %42 = vadd.xlane.f32.xlu0 %v41
    %v43 = vpop.xlane.xlu0 %42
    %v44 = vmul.f32 %v43, 0.001953125
    %v45 = vmul.f32 %v24, %v24
    %v46 = vmul.f32 %v25, %v25
    %v49 = vcombine.high %v45, %v45
    %v50 = vcombine.high %v46, %v46
    %v53 = vsel %vm32, %v45, 0.0
    %v54 = vsel %vm32, %v46, 0.0
    %v55 = vadd.f32 %v53, %v54
    %v56 = vsel %vm32, %v49, 0.0
    %v57 = vsel %vm32, %v50, 0.0
    %v58 = vadd.f32 %v56, %v57
    %v59 = vsel %vm32, %v55, 0.0
    %v60 = vsel %vm32, %v58, 0.0
    %v61 = vadd.f32 %v59, %v60
    %62 = vadd.xlane.f32.xlu0 %v61
    %v63 = vpop.xlane.xlu0 %62
    %v64 = vmul.f32 %v63, 0.001953125
    %v65 = vmul.f32 %v44, %v44
    %v66 = vsub.f32 %v64, %v65
    %v67 = vmax.f32 %v66, 0.0
    %v68 = vld [vmem:[%s3] sm:$0xf]
    %v69 = vadd.f32 %v67, 1e-05
    %v70 = vrsqrt.pop %v69
    %v71 = vmul.f32 %v68, %v70
    %v72 = vld [vmem:[%s4] sm:$0xf]
    %v73 = vmul.f32 %v44, %v71
    %v74 = vsub.f32 %v72, %v73
    %76 = vset.pattern.permute.xlu0 0
    %77 = vperm.xlu0 %76, %v71
    %v78 = vpop.permute.xlu0 %77
    %v80 = vunpack.c.l.s4 839922192
    %v81 = vunpack.c.0.s8 %v80
    %v82 = vlaneseq
    %v83 = vshrl.u32 %v82, 7
    %v84 = vsub.s32 %v81, %v83
    %v85 = vrot.slane %v78, %v84
    %v87 = vmul.f32 %v24, %v85
    %v88 = vmul.f32 %v25, %v85
    %90 = vset.pattern.permute.xlu0 0
    %91 = vperm.xlu0 %90, %v74
    %v92 = vpop.permute.xlu0 %91
    %v94 = vunpack.c.l.s4 839922192
    %v95 = vunpack.c.0.s8 %v94
    %v96 = vlaneseq
    %v97 = vshrl.u32 %v96, 7
    %v98 = vsub.s32 %v95, %v97
    %v99 = vrot.slane %v92, %v98
    %v101 = vadd.f32 %v87, %v99
    %v102 = vadd.f32 %v88, %v99
    %103 = vst [vmem:[#allocation2] sm:$0xff] %v101
    %104 = vst [vmem:[#allocation2 + $0x8] sm:$0xff] %v102
    %v105 = vld [vmem:[%s1] sm:$0xf]
    %v106 = vmul.f32 %v105, 0.9
    %v107 = vmul.f32 %v44, 0.1
    %v108 = vadd.f32 %v106, %v107
    %vm109 = vcmask 3072
    %110 = vst.msk [vmem:[%s6] sm:$0xf] %vm109, %v108
    %v111 = vld [vmem:[%s2] sm:$0xf]
    %v112 = vmul.f32 %v111, 0.9
    %v113 = vmul.f32 %v67, 0.1
    %v114 = vadd.f32 %v112, %v113
    %115 = vst.msk [vmem:[%s7] sm:$0xf] %vm109, %v114
    // Predicated region
    $region22: #{tpu_custom_call.1} parent=1 // pred_check
      _
    $region23: #{tpu_custom_call.1} parent=1 // pred_check_branch
      %117 = sbr.rel (0) target = $region25
    $region24: #{tpu_custom_call.1} parent=1 // pred_region
      %s119 = ssub.s32 256, 256
      %120 = vsyncadd [#allocation3], %s119
      %s121 = sshll.u32 [#allocation2], 4
      %s122 = int_to_ptr.vmem [resolvable:$true] %s121
      %127 = dma.vmem_to_hbm [thread:$0]  %s122, 256, %s5, [#allocation3], 128, 128, 8
    $region25: #{tpu_custom_call.1} parent=1 // pred_fallthru
      _
    // Predicated region
    $region26: #{tpu_custom_call.1} parent=1 // pred_check
      _
    $region27: #{tpu_custom_call.1} parent=1 // pred_check_branch
      %129 = sbr.rel (0) target = $region29
    $region28: #{tpu_custom_call.1} parent=1 // pred_region
      _
    $region29: #{tpu_custom_call.1} parent=1 // pred_fallthru
      _
    // Predicated region
    $region30: #{tpu_custom_call.1} parent=1 // pred_check
      _
    $region31: #{tpu_custom_call.1} parent=1 // pred_check_branch
      %131 = sbr.rel (0) target = $region33
    $region32: #{tpu_custom_call.1} parent=1 // pred_region
      _
    $region33: #{tpu_custom_call.1} parent=1 // pred_fallthru
      _
    // Predicated region
    $region34: #{tpu_custom_call.1} parent=1 // pred_check
      _
    $region35: #{tpu_custom_call.1} parent=1 // pred_check_branch
      %133 = sbr.rel (0) target = $region37
    $region36: #{tpu_custom_call.1} parent=1 // pred_region
      %134 = dma.done [#allocation3], 256
    $region37: #{tpu_custom_call.1} parent=1 // pred_fallthru
      _
    // Predicated region
    $region38: #{tpu_custom_call.1} parent=1 // pred_check
      _
    $region39: #{tpu_custom_call.1} parent=1 // pred_check_branch
      %136 = sbr.rel (0) target = $region41
    $region40: #{tpu_custom_call.1} parent=1 // pred_region
      _
    $region41: #{tpu_custom_call.1} parent=1 // pred_fallthru
      _
    // Predicated region
    $region42: #{tpu_custom_call.1} parent=1 // pred_check
      _
    $region43: #{tpu_custom_call.1} parent=1 // pred_check_branch
      %138 = sbr.rel (0) target = $region45
    $region44: #{tpu_custom_call.1} parent=1 // pred_region
      _
    $region45: #{tpu_custom_call.1} parent=1 // pred_fallthru
      _
    %139 = vsyncpa [#allocation3], 1

</llo_original>
